<compile_context>
chip_gen: v5e
topology: v5e:2x2
jax: 0.10.0
libtpu: 0.0.40
codegen_flags: <defaults>
</compile_context>

<pallas_src>
import math
import jax
import jax.numpy as jnp
from jax.experimental import pallas as pl
from jax.experimental.pallas import tpu as pltpu


def _unary_conv_kernel(x_ref, w_ref, o_ref):
    """One (tm, d_out) output tile: o = x_tile @ W (weight pinned in VMEM)."""
    o_ref[...] = jnp.dot(
        x_ref[...], w_ref[...], preferred_element_type=jnp.float32
    ).astype(o_ref.dtype)


def _round_up(x: int, m: int) -> int:
    return (x + m - 1) // m * m


def unary_conv(features: jax.Array, weight: jax.Array, *, tm: int = 1024) -> jax.Array:
    """features: [N, d_in] f32, weight: [d_in, d_out] f32 -> [N, d_out] f32."""
    N, K = features.shape
    K2, D = weight.shape
    assert K == K2, "feature dim must match weight rows"

    # Row tile: multiple of 8 sublanes, clamped to the (padded) problem size.
    n_pad8 = _round_up(N, 8)
    tm = max(8, min(_round_up(tm, 8), n_pad8))
    # Prefer >= 2 row blocks so the parallel grid axis can shard across the
    # two TensorCores on v7x (no-op on 1-TC chips).
    if n_pad8 // tm < 2 and n_pad8 >= 16:
        tm = _round_up(n_pad8 // 2, 8)

    # Zero-pad N up to a multiple of tm (zero rows contribute zero output).
    N_pad = _round_up(N, tm)
    x = features
    if N_pad != N:
        x = jnp.pad(features, ((0, N_pad - N), (0, 0)))

    grid = (N_pad // tm,)
    itemsize = jnp.dtype(features.dtype).itemsize

    # Rough VMEM footprint: double-buffered feature/output tiles + pinned weight.
    vmem_bytes = 2 * (tm * K + tm * D) * itemsize + 2 * K * D * itemsize
    vmem_limit = int(min(max(4 * vmem_bytes, 16 * 1024 * 1024), 48 * 1024 * 1024))

    cost = pl.CostEstimate(
        flops=2 * N * K * D,
        bytes_accessed=(N * K + K * D + N * D) * itemsize,
        transcendentals=0,
    )

    out = pl.pallas_call(
        _unary_conv_kernel,
        out_shape=jax.ShapeDtypeStruct((N_pad, D), features.dtype),
        grid_spec=pltpu.PrefetchScalarGridSpec(
            num_scalar_prefetch=0,
            grid=grid,
            in_specs=[
                # Streamed feature row-tiles.
                pl.BlockSpec((tm, K), lambda i: (i, 0)),
                # Full weight, constant block index -> DMA'd once, pinned in VMEM.
                pl.BlockSpec((K, D), lambda i: (0, 0)),
            ],
            out_specs=pl.BlockSpec((tm, D), lambda i: (i, 0)),
        ),
        compiler_params=pltpu.CompilerParams(
            dimension_semantics=("parallel",),
            vmem_limit_bytes=vmem_limit,
        ),
        cost_estimate=cost,
    )(x, weight)

    return out[:N] if N_pad != N else out


def xavier_normal(key, shape):
    """Deterministic stand-in for torch.nn.init.xavier_normal_ on a 2-D weight."""
    fan_in, fan_out = shape
    std = math.sqrt(2.0 / (fan_in + fan_out))
    return std * jax.random.normal(key, shape, dtype=jnp.float32)


if __name__ == "__main__":
    num_inputs = 128    # d_in
    num_outputs = 256   # d_out
    n_points = 256      # N

    key = jax.random.PRNGKey(0)
    k_feat, k_w = jax.random.split(key)

    features = jax.random.normal(k_feat, (n_points, num_inputs), dtype=jnp.float32)
    weight = xavier_normal(k_w, (num_inputs, num_outputs))

    out = unary_conv(features, weight)
    out = jax.block_until_ready(out)

    # Correctness check against plain JAX reference (torch.matmul semantics).
    ref = features @ weight
    assert out.shape == (n_points, num_outputs)
    assert jnp.allclose(out, ref, atol=1e-4, rtol=1e-4)

    print("KERNEL_OK")
</pallas_src>

<mosaic_0001>
module attributes {stable_mosaic.version = 11 : i64} {
  func.func @_unary_conv_kernel(%arg0: i32, %arg1: memref<128x128xf32, #tpu.memory_space<vmem>>, %arg2: memref<128x256xf32, #tpu.memory_space<vmem>>, %arg3: memref<128x256xf32, #tpu.memory_space<vmem>>) attributes {dimension_semantics = [#tpu.dimension_semantics<parallel>], iteration_bounds = array<i64: 2>, scalar_prefetch = 0 : i64, scratch_operands = 0 : i64, tpu.core_type = #tpu.core_type<tc>, window_params = [{transform_indices = @transform_0, window_bounds = array<i64: 128, 128>}, {pipeline_mode = #tpu.pipeline_mode<synchronous>, transform_indices = @transform_1, window_bounds = array<i64: 128, 256>}, {transform_indices = @transform_2, window_bounds = array<i64: 128, 256>}]} {
    %c0 = arith.constant 0 : index
    %c0_0 = arith.constant 0 : index
    %0 = vector.load %arg1[%c0, %c0_0] : memref<128x128xf32, #tpu.memory_space<vmem>>, vector<128x128xf32>
    %c0_1 = arith.constant 0 : index
    %c0_2 = arith.constant 0 : index
    %1 = vector.load %arg2[%c0_1, %c0_2] : memref<128x256xf32, #tpu.memory_space<vmem>>, vector<128x256xf32>
    %cst = arith.constant dense<0.000000e+00> : vector<128x256xf32>
    %2 = tpu.matmul %0, %1, %cst {dimension_numbers = #tpu.dot_dimension_numbers<[1], [0], [0], [1], [0, 0, 1, 1], [], []>} : vector<128x128xf32>, vector<128x256xf32>, vector<128x256xf32> -> vector<128x256xf32>
    %c0_3 = arith.constant 0 : index
    %c0_4 = arith.constant 0 : index
    %3 = vector.load %arg3[%c0_3, %c0_4] : memref<128x256xf32, #tpu.memory_space<vmem>>, vector<128x256xf32>
    tpu.vector_store %arg3[%c0_3, %c0_4], %2 {strides = array<i32>} : memref<128x256xf32, #tpu.memory_space<vmem>>, vector<128x256xf32>,
    return
  }
  func.func @transform_0(%arg0: i32) -> (i32, i32) {
    %c0_i32 = arith.constant 0 : i32
    %c0_i32_0 = arith.constant 0 : i32
    return %arg0, %c0_i32 : i32, i32
  }
  func.func @transform_1(%arg0: i32) -> (i32, i32) {
    %c0_i32 = arith.constant 0 : i32
    %c0_i32_0 = arith.constant 0 : i32
    %c0_i32_1 = arith.constant 0 : i32
    return %c0_i32, %c0_i32_0 : i32, i32
  }
  func.func @transform_2(%arg0: i32) -> (i32, i32) {
    %c0_i32 = arith.constant 0 : i32
    %c0_i32_0 = arith.constant 0 : i32
    return %arg0, %c0_i32 : i32, i32
  }
}

</mosaic_0001>

<llo_original>
// kernel: tpu_custom_call.1
$region0: #{tpu_custom_call.1}
  #allocation0 [shape = 'u32[]', space=smem, size = 0x4, offset = 0x4, fixed_abs, tag = 'smem constant byte address 0x4 - core index']
  #allocation1 [shape = 'u32[72,128]{1,0:T(1,128)}', space=vmem, size = 0x9000, scoped, tag = 'internal scratch']
  %s0 = inlined_call_operand.hbm [shape: f32[256,128], index: 0, kind: input, shape index: {}]
  %s1 = inlined_call_operand.hbm [shape: f32[128,256], index: 1, kind: input, shape index: {}]
  %s2 = inlined_call_operand.hbm [shape: f32[256,256], index: 2, kind: output, shape index: {}]
  %s3 = sld [smem:[#allocation0]]
  $region49: #{tpu_custom_call.1} parent=0
    _
  %s5 = ssub.s32 1, %s3
  %s6 = scalar_select 0, %s5, %s3
  $region1: #{tpu_custom_call.1} parent=0
    #allocation2 [shape = 'u8[131072]{0}', space=vmem, size = 0x20000, scoped, tag = 'input window, operand 0']
    #allocation3 [shape = 's32[2]{0}', space=sflag, size = 0x8, scoped, tag = 'scoped memory for tpu_custom_call.1']
    #allocation4 [shape = 's32[2]{0}', space=sflag, size = 0x8, scoped, tag = 'scoped memory for tpu_custom_call.1']
    #allocation5 [shape = 'u8[131072]{0}', space=vmem, size = 0x20000, scoped, tag = 'input window, operand 1, single buffered']
    #allocation6 [shape = 's32[1]{0}', space=sflag, size = 0x4, scoped, tag = 'scoped memory for tpu_custom_call.1']
    #allocation7 [shape = 'u8[262144]{0}', space=vmem, size = 0x40000, scoped, tag = 'output window, operand 0']
    %7 = vsyncpa [#allocation3], 0
    %s8 = scalar_lea.sflag [#allocation3], 1
    %9 = vsyncpa %s8, 0
    %10 = vsyncpa [#allocation6], 0
    %11 = vsyncpa [#allocation4], 0
    %s12 = scalar_lea.sflag [#allocation4], 1
    %13 = vsyncpa %s12, 0
    loop: start=0, step=1, limit=4
    $region2: #{tpu_custom_call.1} parent=1 // loop_pre_header
      _
    $region3: #{tpu_custom_call.1} parent=1 // loop_header
      %s15 = sphi 0, %s19
      %p16 = scmp.ge.s32.totalorder %s15, 4
      %s25 = sphi 0, %s27
      %s28 = sphi 0, %s25
      %s29 = sphi 0, %s28
      %s45 = sphi 0, %s29
      %s49 = sphi 0, %s49
      %s51 = sphi 0, %s49
      %s52 = sphi 0, %s51
      %s66 = sphi 0, %s52
      %s72 = sphi 0, %s74
      %s75 = sphi 0, %s72
      %s76 = sphi 0, %s75
      %s92 = sphi 0, %s76
    $region4: #{tpu_custom_call.1} parent=1 // loop_header_branch
      %18 = sbr.rel (%p16) target = $region8
    $region5: #{tpu_custom_call.1} parent=1 // loop_body
      %s20 = ssub.s32 %s15, 1
      %s21 = ssub.s32 %s15, 2
      %s22 = sadd.s32 %s15, 1
      %s23 = ssub.s32 %s15, %s22
      %p24 = scmp.eq.s32.totalorder %s23, 0
      %s26 = sadd.s32 %s25, 1
      %s27 = scalar_select %p24, %s25, %s26
      %p30 = pneg %p24
      %p31 = scmp.eq.s32.totalorder %s15, 1
      %p32 = por %p30, %p31
      %p33 = scmp.ne.s32.totalorder %s25, %s28
      %p34 = scmp.eq.s32.totalorder %s15, 0
      %p35 = por %p33, %p34
      %p36 = scmp.ne.s32.totalorder %s25, %s28
      %p37 = scmp.eq.s32.totalorder %s20, 1
      %p38 = por %p36, %p37
      %p39 = scmp.ne.s32.totalorder %s28, %s29
      %p40 = scmp.eq.s32.totalorder %s20, 0
      %p41 = por %p39, %p40
      %p42 = scmp.ne.s32.totalorder %s28, %s29
      %p43 = scmp.eq.s32.totalorder %s21, 1
      %p44 = por %p42, %p43
      %p46 = scmp.ne.s32.totalorder %s29, %s45
      %p47 = scmp.eq.s32.totalorder %s21, 0
      %p48 = por %p46, %p47
      %s50 = sadd.s32 %s49, 1
      %p53 = scmp.eq.s32.totalorder %s15, 1
      %p54 = scmp.ne.s32.totalorder %s49, %s51
      %p55 = scmp.eq.s32.totalorder %s15, 0
      %p56 = por %p54, %p55
      %p57 = scmp.ne.s32.totalorder %s49, %s51
      %p58 = scmp.eq.s32.totalorder %s20, 1
      %p59 = por %p57, %p58
      %p60 = scmp.ne.s32.totalorder %s51, %s52
      %p61 = scmp.eq.s32.totalorder %s20, 0
      %p62 = por %p60, %p61
      %p63 = scmp.ne.s32.totalorder %s51, %s52
      %p64 = scmp.eq.s32.totalorder %s21, 1
      %p65 = por %p63, %p64
      %p67 = scmp.ne.s32.totalorder %s52, %s66
      %p68 = scmp.eq.s32.totalorder %s21, 0
      %p69 = por %p67, %p68
      %s70 = ssub.s32 %s15, %s22
      %p71 = scmp.eq.s32.totalorder %s70, 0
      %s73 = sadd.s32 %s72, 1
      %s74 = scalar_select %p71, %s72, %s73
      %p77 = pneg %p71
      %p78 = scmp.eq.s32.totalorder %s15, 1
      %p79 = por %p77, %p78
      %p80 = scmp.ne.s32.totalorder %s72, %s75
      %p81 = scmp.eq.s32.totalorder %s15, 0
      %p82 = por %p80, %p81
      %p83 = scmp.ne.s32.totalorder %s72, %s75
      %p84 = scmp.eq.s32.totalorder %s20, 1
      %p85 = por %p83, %p84
      %p86 = scmp.ne.s32.totalorder %s75, %s76
      %p87 = scmp.eq.s32.totalorder %s20, 0
      %p88 = por %p86, %p87
      %p89 = scmp.ne.s32.totalorder %s75, %s76
      %p90 = scmp.eq.s32.totalorder %s21, 1
      %p91 = por %p89, %p90
      %p93 = scmp.ne.s32.totalorder %s76, %s92
      %p94 = scmp.eq.s32.totalorder %s21, 0
      %p95 = por %p93, %p94
      %p96 = scmp.le.s32.totalorder 1, %s15
      %p97 = scmp.lt.s32.totalorder %s15, 3
      %p98 = pnand %p96, %p97
      %p99 = pneg %p98
      // Predicated region
      $region9: #{tpu_custom_call.1} parent=5 // pred_check
        _
      $region10: #{tpu_custom_call.1} parent=5 // pred_check_branch
        %101 = sbr.rel (%p98) target = $region12
      $region11: #{tpu_custom_call.1} parent=5 // pred_region
        %s102 = ssub.s32 %s15, 1
        // Predicated region
        $region13: #{tpu_custom_call.1} parent=11 // pred_check
          %p103 = pneg %p62
        $region14: #{tpu_custom_call.1} parent=11 // pred_check_branch
          %105 = sbr.rel (%p103) target = $region16
        $region15: #{tpu_custom_call.1} parent=11 // pred_region
          %107 = vsyncadd [#allocation6], 0
          %s108 = sshll.u32 %s1, 4
          %s109 = int_to_ptr.hbm [resolvable:$true] %s108
          %s110 = sshll.u32 [#allocation5], 4
          %s111 = int_to_ptr.vmem [resolvable:$true] %s110
          %116 = dma.hbm_to_vmem [thread:$0]  %s109, 4096, %s111, [#allocation6], 256, 256, 16
        $region16: #{tpu_custom_call.1} parent=11 // pred_fallthru
          _
      $region12: #{tpu_custom_call.1} parent=5 // pred_fallthru
        _
      %p117 = scmp.lt.s32.totalorder %s15, 2
      // Predicated region
      $region17: #{tpu_custom_call.1} parent=5 // pred_check
        %p118 = pneg %p117
      $region18: #{tpu_custom_call.1} parent=5 // pred_check_branch
        %120 = sbr.rel (%p118) target = $region20
      $region19: #{tpu_custom_call.1} parent=5 // pred_region
        // Predicated region
        $region21: #{tpu_custom_call.1} parent=19 // pred_check
          %p121 = pneg %p35
        $region22: #{tpu_custom_call.1} parent=19 // pred_check_branch
          %123 = sbr.rel (%p121) target = $region24
        $region23: #{tpu_custom_call.1} parent=19 // pred_region
          %s124 = sand.u32 %s25, 1
          %s125 = scalar_lea.sflag [#allocation3], %s124
          %s126 = sand.u32 %s25, 1
          %s127 = smul.addr %s126, 128
          %s128 = scalar_lea.vmem [#allocation2], %s127
          %s129 = smul.u32 16, %s15
          %131 = vsyncadd %s125, 0
          %s132 = smul.addr %s129, 8
          %s133 = scalar_lea.hbm %s0, %s132
          %s134 = sshll.u32 %s133, 4
          %s135 = int_to_ptr.hbm [resolvable:$true] %s134
          %s136 = sshll.u32 %s128, 4
          %s137 = int_to_ptr.vmem [resolvable:$true] %s136
          %142 = dma.hbm_to_vmem [thread:$0]  %s135, 2048, %s137, %s125, 128, 128, 8
        $region24: #{tpu_custom_call.1} parent=19 // pred_fallthru
          _
      $region20: #{tpu_custom_call.1} parent=5 // pred_fallthru
        _
      %p143 = scmp.le.s32.totalorder 1, %s15
      %p144 = scmp.lt.s32.totalorder %s15, 3
      %p145 = pnand %p143, %p144
      %p146 = pneg %p145
      // Predicated region
      $region25: #{tpu_custom_call.1} parent=5 // pred_check
        _
      $region26: #{tpu_custom_call.1} parent=5 // pred_check_branch
        %148 = sbr.rel (%p145) target = $region28
      $region27: #{tpu_custom_call.1} parent=5 // pred_region
        %s149 = ssub.s32 %s15, 1
        %s150 = sand.u32 %s28, 1
        %s151 = scalar_lea.sflag [#allocation3], %s150
        %s152 = sand.u32 %s28, 1
        %s153 = smul.addr %s152, 128
        %s154 = scalar_lea.vmem [#allocation2], %s153
        // Predicated region
        $region29: #{tpu_custom_call.1} parent=27 // pred_check
          %p155 = pneg %p41
        $region30: #{tpu_custom_call.1} parent=27 // pred_check_branch
          %157 = sbr.rel (%p155) target = $region32
        $region31: #{tpu_custom_call.1} parent=27 // pred_region
          %159 = dma.done %s151, 2048
        $region32: #{tpu_custom_call.1} parent=27 // pred_fallthru
          _
        // Predicated region
        $region33: #{tpu_custom_call.1} parent=27 // pred_check
          %p160 = pneg %p62
        $region34: #{tpu_custom_call.1} parent=27 // pred_check_branch
          %162 = sbr.rel (%p160) target = $region36
        $region35: #{tpu_custom_call.1} parent=27 // pred_region
          %164 = dma.done [#allocation6], 4096
        $region36: #{tpu_custom_call.1} parent=27 // pred_fallthru
          _
        %s165 = sand.u32 %s28, 1
        %s166 = scalar_lea.sflag [#allocation3], %s165
        %s167 = sand.u32 %s28, 1
        %s168 = smul.addr %s167, 128
        %s169 = scalar_lea.vmem [#allocation2], %s168
        %p170 = pneg %p41
        %p171 = pneg %p38
        %p172 = pneg %p62
        %p173 = pneg %p59
        %p174 = pneg %p88
        %p175 = pneg %p85
        %s176 = sand.u32 %s75, 1
        %s177 = scalar_lea.sflag [#allocation4], %s176
        %s178 = sand.u32 %s75, 1
        %s179 = smul.addr %s178, 256
        %s180 = scalar_lea.vmem [#allocation7], %s179
        %s181 = smul.u32 16, %s20
        %s182 = smul.u32 16, %s20
        %v183 = vld [vmem:[%s154] sm:$0xff]
        %v184 = vld [vmem:[%s154 + $0x8] sm:$0xff]
        %v185 = vld [vmem:[%s154 + $0x10] sm:$0xff]
        %v186 = vld [vmem:[%s154 + $0x18] sm:$0xff]
        %v187 = vld [vmem:[%s154 + $0x20] sm:$0xff]
        %v188 = vld [vmem:[%s154 + $0x28] sm:$0xff]
        %v189 = vld [vmem:[%s154 + $0x30] sm:$0xff]
        %v190 = vld [vmem:[%s154 + $0x38] sm:$0xff]
        %v191 = vld [vmem:[%s154 + $0x40] sm:$0xff]
        %v192 = vld [vmem:[%s154 + $0x48] sm:$0xff]
        %v193 = vld [vmem:[%s154 + $0x50] sm:$0xff]
        %v194 = vld [vmem:[%s154 + $0x58] sm:$0xff]
        %v195 = vld [vmem:[%s154 + $0x60] sm:$0xff]
        %v196 = vld [vmem:[%s154 + $0x68] sm:$0xff]
        %v197 = vld [vmem:[%s154 + $0x70] sm:$0xff]
        %v198 = vld [vmem:[%s154 + $0x78] sm:$0xff]
        %v199 = vld [vmem:[#allocation5] sm:$0xff]
        %v200 = vld [vmem:[#allocation5 + $0x8] sm:$0xff]
        %v201 = vld [vmem:[#allocation5 + $0x10] sm:$0xff]
        %v202 = vld [vmem:[#allocation5 + $0x18] sm:$0xff]
        %v203 = vld [vmem:[#allocation5 + $0x20] sm:$0xff]
        %v204 = vld [vmem:[#allocation5 + $0x28] sm:$0xff]
        %v205 = vld [vmem:[#allocation5 + $0x30] sm:$0xff]
        %v206 = vld [vmem:[#allocation5 + $0x38] sm:$0xff]
        %v207 = vld [vmem:[#allocation5 + $0x40] sm:$0xff]
        %v208 = vld [vmem:[#allocation5 + $0x48] sm:$0xff]
        %v209 = vld [vmem:[#allocation5 + $0x50] sm:$0xff]
        %v210 = vld [vmem:[#allocation5 + $0x58] sm:$0xff]
        %v211 = vld [vmem:[#allocation5 + $0x60] sm:$0xff]
        %v212 = vld [vmem:[#allocation5 + $0x68] sm:$0xff]
        %v213 = vld [vmem:[#allocation5 + $0x70] sm:$0xff]
        %v214 = vld [vmem:[#allocation5 + $0x78] sm:$0xff]
        %v215 = vld [vmem:[#allocation5 + $0x80] sm:$0xff]
        %v216 = vld [vmem:[#allocation5 + $0x88] sm:$0xff]
        %v217 = vld [vmem:[#allocation5 + $0x90] sm:$0xff]
        %v218 = vld [vmem:[#allocation5 + $0x98] sm:$0xff]
        %v219 = vld [vmem:[#allocation5 + $0xa0] sm:$0xff]
        %v220 = vld [vmem:[#allocation5 + $0xa8] sm:$0xff]
        %v221 = vld [vmem:[#allocation5 + $0xb0] sm:$0xff]
        %v222 = vld [vmem:[#allocation5 + $0xb8] sm:$0xff]
        %v223 = vld [vmem:[#allocation5 + $0xc0] sm:$0xff]
        %v224 = vld [vmem:[#allocation5 + $0xc8] sm:$0xff]
        %v225 = vld [vmem:[#allocation5 + $0xd0] sm:$0xff]
        %v226 = vld [vmem:[#allocation5 + $0xd8] sm:$0xff]
        %v227 = vld [vmem:[#allocation5 + $0xe0] sm:$0xff]
        %v228 = vld [vmem:[#allocation5 + $0xe8] sm:$0xff]
        %v229 = vld [vmem:[#allocation5 + $0xf0] sm:$0xff]
        %v230 = vld [vmem:[#allocation5 + $0xf8] sm:$0xff]
        %231 = vmatpush.msra.mxu0 %v229
        %232 = vmatpush.msra.mxu0 %v227
        %233 = vmatpush.msra.mxu0 %v225
        %234 = vmatpush.msra.mxu0 %v223
        %235 = vmatpush.msra.mxu0 %v221
        %236 = vmatpush.msra.mxu0 %v219
        %237 = vmatpush.msra.mxu0 %v217
        %238 = vmatpush.msra.mxu0 %v215
        %239 = vmatpush.msra.mxu0 %v213
        %240 = vmatpush.msra.mxu0 %v211
        %241 = vmatpush.msra.mxu0 %v209
        %242 = vmatpush.msra.mxu0 %v207
        %243 = vmatpush.msra.mxu0 %v205
        %244 = vmatpush.msra.mxu0 %v203
        %245 = vmatpush.msra.mxu0 %v201
        %246 = vmatpush.msra.mxu0 %v199
        %247 = vmatmul.f32.gmra.mxu0 %v183
        %v248 = vpop.f32.mrf.mxu0
        %v249 = vadd.f32 0.0, %v248
        %250 = vmatmul.f32.gmra.mxu0 %v184
        %v251 = vpop.f32.mrf.mxu0
        %v252 = vadd.f32 0.0, %v251
        %253 = vmatmul.f32.gmra.mxu0 %v185
        %v254 = vpop.f32.mrf.mxu0
        %v255 = vadd.f32 0.0, %v254
        %256 = vmatmul.f32.gmra.mxu0 %v186
        %v257 = vpop.f32.mrf.mxu0
        %v258 = vadd.f32 0.0, %v257
        %259 = vmatmul.f32.gmra.mxu0 %v187
        %v260 = vpop.f32.mrf.mxu0
        %v261 = vadd.f32 0.0, %v260
        %262 = vmatmul.f32.gmra.mxu0 %v188
        %v263 = vpop.f32.mrf.mxu0
        %v264 = vadd.f32 0.0, %v263
        %265 = vmatmul.f32.gmra.mxu0 %v189
        %v266 = vpop.f32.mrf.mxu0
        %v267 = vadd.f32 0.0, %v266
        %268 = vmatmul.f32.gmra.mxu0 %v190
        %v269 = vpop.f32.mrf.mxu0
        %v270 = vadd.f32 0.0, %v269
        %271 = vmatmul.f32.gmra.mxu0 %v191
        %v272 = vpop.f32.mrf.mxu0
        %v273 = vadd.f32 0.0, %v272
        %274 = vmatmul.f32.gmra.mxu0 %v192
        %v275 = vpop.f32.mrf.mxu0
        %v276 = vadd.f32 0.0, %v275
        %277 = vmatmul.f32.gmra.mxu0 %v193
        %v278 = vpop.f32.mrf.mxu0
        %v279 = vadd.f32 0.0, %v278
        %280 = vmatmul.f32.gmra.mxu0 %v194
        %v281 = vpop.f32.mrf.mxu0
        %v282 = vadd.f32 0.0, %v281
        %283 = vmatmul.f32.gmra.mxu0 %v195
        %v284 = vpop.f32.mrf.mxu0
        %v285 = vadd.f32 0.0, %v284
        %286 = vmatmul.f32.gmra.mxu0 %v196
        %v287 = vpop.f32.mrf.mxu0
        %v288 = vadd.f32 0.0, %v287
        %289 = vmatmul.f32.gmra.mxu0 %v197
        %v290 = vpop.f32.mrf.mxu0
        %v291 = vadd.f32 0.0, %v290
        %292 = vmatmul.f32.gmra.mxu0 %v198
        %v293 = vpop.f32.mrf.mxu0
        %v294 = vadd.f32 0.0, %v293
        %295 = vdwg.mxu0
        %296 = vmatpush.msra.mxu0 %v230
        %297 = vmatpush.msra.mxu0 %v228
        %298 = vmatpush.msra.mxu0 %v226
        %299 = vmatpush.msra.mxu0 %v224
        %300 = vmatpush.msra.mxu0 %v222
        %301 = vmatpush.msra.mxu0 %v220
        %302 = vmatpush.msra.mxu0 %v218
        %303 = vmatpush.msra.mxu0 %v216
        %304 = vmatpush.msra.mxu0 %v214
        %305 = vmatpush.msra.mxu0 %v212
        %306 = vmatpush.msra.mxu0 %v210
        %307 = vmatpush.msra.mxu0 %v208
        %308 = vmatpush.msra.mxu0 %v206
        %309 = vmatpush.msra.mxu0 %v204
        %310 = vmatpush.msra.mxu0 %v202
        %311 = vmatpush.msra.mxu0 %v200
        %312 = vmatmul.f32.gmra.mxu0 %v183
        %v313 = vpop.f32.mrf.mxu0
        %v314 = vadd.f32 0.0, %v313
        %315 = vmatmul.f32.gmra.mxu0 %v184
        %v316 = vpop.f32.mrf.mxu0
        %v317 = vadd.f32 0.0, %v316
        %318 = vmatmul.f32.gmra.mxu0 %v185
        %v319 = vpop.f32.mrf.mxu0
        %v320 = vadd.f32 0.0, %v319
        %321 = vmatmul.f32.gmra.mxu0 %v186
        %v322 = vpop.f32.mrf.mxu0
        %v323 = vadd.f32 0.0, %v322
        %324 = vmatmul.f32.gmra.mxu0 %v187
        %v325 = vpop.f32.mrf.mxu0
        %v326 = vadd.f32 0.0, %v325
        %327 = vmatmul.f32.gmra.mxu0 %v188
        %v328 = vpop.f32.mrf.mxu0
        %v329 = vadd.f32 0.0, %v328
        %330 = vmatmul.f32.gmra.mxu0 %v189
        %v331 = vpop.f32.mrf.mxu0
        %v332 = vadd.f32 0.0, %v331
        %333 = vmatmul.f32.gmra.mxu0 %v190
        %v334 = vpop.f32.mrf.mxu0
        %v335 = vadd.f32 0.0, %v334
        %336 = vmatmul.f32.gmra.mxu0 %v191
        %v337 = vpop.f32.mrf.mxu0
        %v338 = vadd.f32 0.0, %v337
        %339 = vmatmul.f32.gmra.mxu0 %v192
        %v340 = vpop.f32.mrf.mxu0
        %v341 = vadd.f32 0.0, %v340
        %342 = vmatmul.f32.gmra.mxu0 %v193
        %v343 = vpop.f32.mrf.mxu0
        %v344 = vadd.f32 0.0, %v343
        %345 = vmatmul.f32.gmra.mxu0 %v194
        %v346 = vpop.f32.mrf.mxu0
        %v347 = vadd.f32 0.0, %v346
        %348 = vmatmul.f32.gmra.mxu0 %v195
        %v349 = vpop.f32.mrf.mxu0
        %v350 = vadd.f32 0.0, %v349
        %351 = vmatmul.f32.gmra.mxu0 %v196
        %v352 = vpop.f32.mrf.mxu0
        %v353 = vadd.f32 0.0, %v352
        %354 = vmatmul.f32.gmra.mxu0 %v197
        %v355 = vpop.f32.mrf.mxu0
        %v356 = vadd.f32 0.0, %v355
        %357 = vmatmul.f32.gmra.mxu0 %v198
        %v358 = vpop.f32.mrf.mxu0
        %v359 = vadd.f32 0.0, %v358
        %360 = vdwg.mxu0
        %361 = vst [vmem:[%s180] sm:$0xff] %v249
        %362 = vst [vmem:[%s180 + $0x8] sm:$0xff] %v314
        %363 = vst [vmem:[%s180 + $0x10] sm:$0xff] %v252
        %364 = vst [vmem:[%s180 + $0x18] sm:$0xff] %v317
        %365 = vst [vmem:[%s180 + $0x20] sm:$0xff] %v255
        %366 = vst [vmem:[%s180 + $0x28] sm:$0xff] %v320
        %367 = vst [vmem:[%s180 + $0x30] sm:$0xff] %v258
        %368 = vst [vmem:[%s180 + $0x38] sm:$0xff] %v323
        %369 = vst [vmem:[%s180 + $0x40] sm:$0xff] %v261
        %370 = vst [vmem:[%s180 + $0x48] sm:$0xff] %v326
        %371 = vst [vmem:[%s180 + $0x50] sm:$0xff] %v264
        %372 = vst [vmem:[%s180 + $0x58] sm:$0xff] %v329
        %373 = vst [vmem:[%s180 + $0x60] sm:$0xff] %v267
        %374 = vst [vmem:[%s180 + $0x68] sm:$0xff] %v332
        %375 = vst [vmem:[%s180 + $0x70] sm:$0xff] %v270
        %376 = vst [vmem:[%s180 + $0x78] sm:$0xff] %v335
        %377 = vst [vmem:[%s180 + $0x80] sm:$0xff] %v273
        %378 = vst [vmem:[%s180 + $0x88] sm:$0xff] %v338
        %379 = vst [vmem:[%s180 + $0x90] sm:$0xff] %v276
        %380 = vst [vmem:[%s180 + $0x98] sm:$0xff] %v341
        %381 = vst [vmem:[%s180 + $0xa0] sm:$0xff] %v279
        %382 = vst [vmem:[%s180 + $0xa8] sm:$0xff] %v344
        %383 = vst [vmem:[%s180 + $0xb0] sm:$0xff] %v282
        %384 = vst [vmem:[%s180 + $0xb8] sm:$0xff] %v347
        %385 = vst [vmem:[%s180 + $0xc0] sm:$0xff] %v285
        %386 = vst [vmem:[%s180 + $0xc8] sm:$0xff] %v350
        %387 = vst [vmem:[%s180 + $0xd0] sm:$0xff] %v288
        %388 = vst [vmem:[%s180 + $0xd8] sm:$0xff] %v353
        %389 = vst [vmem:[%s180 + $0xe0] sm:$0xff] %v291
        %390 = vst [vmem:[%s180 + $0xe8] sm:$0xff] %v356
        %391 = vst [vmem:[%s180 + $0xf0] sm:$0xff] %v294
        %392 = vst [vmem:[%s180 + $0xf8] sm:$0xff] %v359
        %s393 = sand.u32 %s75, 1
        %s394 = scalar_lea.sflag [#allocation4], %s393
        %s395 = sand.u32 %s75, 1
        %s396 = smul.addr %s395, 256
        %s397 = scalar_lea.vmem [#allocation7], %s396
        // Predicated region
        $region37: #{tpu_custom_call.1} parent=27 // pred_check
          %p398 = pneg %p85
        $region38: #{tpu_custom_call.1} parent=27 // pred_check_branch
          %400 = sbr.rel (%p398) target = $region40
        $region39: #{tpu_custom_call.1} parent=27 // pred_region
          %s401 = smul.u32 16, %s20
          %403 = vsyncadd %s394, 0
          %s404 = smul.addr %s401, 2
          %s405 = smul.addr %s404, 8
          %s406 = scalar_lea.hbm %s2, %s405
          %s407 = sshll.u32 %s397, 4
          %s408 = int_to_ptr.vmem [resolvable:$true] %s407
          %s409 = sshll.u32 %s406, 4
          %s410 = int_to_ptr.hbm [resolvable:$true] %s409
          %415 = dma.vmem_to_hbm [thread:$0]  %s408, 4096, %s410, %s394, 256, 256, 16
        $region40: #{tpu_custom_call.1} parent=27 // pred_fallthru
          _
      $region28: #{tpu_custom_call.1} parent=5 // pred_fallthru
        _
      %p416 = scmp.le.s32.totalorder 2, %s15
      // Predicated region
      $region41: #{tpu_custom_call.1} parent=5 // pred_check
        %p417 = pneg %p416
      $region42: #{tpu_custom_call.1} parent=5 // pred_check_branch
        %419 = sbr.rel (%p417) target = $region44
      $region43: #{tpu_custom_call.1} parent=5 // pred_region
        %s420 = ssub.s32 %s15, 2
        // Predicated region
        $region45: #{tpu_custom_call.1} parent=43 // pred_check
          %p421 = pneg %p91
        $region46: #{tpu_custom_call.1} parent=43 // pred_check_branch
          %423 = sbr.rel (%p421) target = $region48
        $region47: #{tpu_custom_call.1} parent=43 // pred_region
          %s424 = sand.u32 %s76, 1
          %s425 = scalar_lea.sflag [#allocation4], %s424
          %s426 = sand.u32 %s76, 1
          %s427 = smul.addr %s426, 256
          %s428 = scalar_lea.vmem [#allocation7], %s427
          %430 = dma.done %s425, 4096
        $region48: #{tpu_custom_call.1} parent=43 // pred_fallthru
          _
      $region44: #{tpu_custom_call.1} parent=5 // pred_fallthru
        _
    $region6: #{tpu_custom_call.1} parent=1 // loop_footer
      %s19 = sadd.s32 1, %s15
    $region7: #{tpu_custom_call.1} parent=1 // loop_footer_branch
      %14 = sbr.rel target = $region3
    $region8: #{tpu_custom_call.1} parent=1 // loop_exit
      _
    %431 = vsyncpa [#allocation3], 1
    %s432 = scalar_lea.sflag [#allocation3], 1
    %433 = vsyncpa %s432, 1
    %434 = vsyncpa [#allocation6], 1
    %435 = vsyncpa [#allocation4], 1
    %s436 = scalar_lea.sflag [#allocation4], 1
    %437 = vsyncpa %s436, 1

</llo_original>
